<compile_context>
chip_gen: v7x
topology: tpu7x:2x2x1
jax: 0.10.0
libtpu: 0.0.40
codegen_flags: <defaults>
</compile_context>

<pallas_src>
import jax
import jax.numpy as jnp
from jax.experimental import pallas as pl
from jax.experimental.pallas import tpu as pltpu

# --- problem sizes (env.num_state / env.num_action are env-dependent; small
#     synthetic values consistent with the module) ---
NUM_STATE = 16
NUM_ACTION = 8
H1 = 64                     # layer1 / layer2 width
H2 = 32                     # layer3 / layer4 width
MAX_TILE_B = 2048           # per-step rows; VMEM footprint stays < 1 MiB


def _dueling_kernel(x_ref, w_ref, b_ref, out_ref):
    """One tile of batch rows through the full dueling forward (4 MXU dots)."""
    x = x_ref[...]                                              # [TB, S] bf16

    # layer1 + relu  (static ref slice skips the zero-padded rows of plane 0)
    h = jnp.dot(x, w_ref[0, :NUM_STATE, :],
                preferred_element_type=jnp.float32)
    h = jnp.maximum(h + b_ref[0:1, :], 0.0)

    # layer2 + relu
    h = jnp.dot(h.astype(jnp.bfloat16), w_ref[1],
                preferred_element_type=jnp.float32)
    h = jnp.maximum(h + b_ref[1:2, :], 0.0)

    # fused layer3|layer4 + relu -> [TB, 64] = [adv_hidden(32) | sv_hidden(32)]
    g = jnp.dot(h.astype(jnp.bfloat16), w_ref[2],
                preferred_element_type=jnp.float32)
    g = jnp.maximum(g + b_ref[2:3, :], 0.0)

    # head matmul with the dueling combine folded into the weights: Q directly.
    q = jnp.dot(g.astype(jnp.bfloat16), w_ref[3],
                preferred_element_type=jnp.float32)
    out_ref[...] = q[:, :NUM_ACTION] + b_ref[3:4, :NUM_ACTION]


def _choose_tiling(batch, max_tile=MAX_TILE_B):
    """Return (padded_batch, tile_b).

    Few large tiles; an even number of grid steps for batches > 128 so the
    'parallel' grid axis shards across both TensorCores on v7x.  On single-TC
    v5e/v6e the extra step costs ~0.35us, which is negligible.
    """
    if batch <= 128:
        padded = 8 * pl.cdiv(batch, 8)
        return padded, padded
    steps = 2 * pl.cdiv(batch, 2 * max_tile)
    tile = 8 * pl.cdiv(pl.cdiv(batch, steps), 8)
    return tile * steps, tile


@jax.jit
def dueling_net_forward(x, w_slab, b_slab):
    """x: [B, NUM_STATE] f32; w_slab: [4, H1, H1] f32; b_slab: [4, H1] f32."""
    batch = x.shape[0]
    padded, tile_b = _choose_tiling(batch)
    if padded != batch:
        x = jnp.pad(x, ((0, padded - batch), (0, 0)))

    # bf16 MXU operands, f32 accumulation (biases / elementwise stay f32).
    x_bf16 = x.astype(jnp.bfloat16)
    w_bf16 = w_slab.astype(jnp.bfloat16)

    grid = (padded // tile_b,)
    flops = 2 * padded * (NUM_STATE * H1 + H1 * H1 + H1 * H1 + H1 * H1)
    bytes_accessed = (padded * NUM_STATE * 2 + w_bf16.size * 2 +
                      b_slab.size * 4 + padded * NUM_ACTION * 4)

    out = pl.pallas_call(
        _dueling_kernel,
        out_shape=jax.ShapeDtypeStruct((padded, NUM_ACTION), jnp.float32),
        grid_spec=pltpu.PrefetchScalarGridSpec(
            num_scalar_prefetch=0,
            grid=grid,
            in_specs=[
                pl.BlockSpec((tile_b, NUM_STATE), lambda i: (i, 0)),
                # Weight / bias slabs: same block index every step -> resident.
                pl.BlockSpec((4, H1, H1), lambda i: (0, 0, 0)),
                pl.BlockSpec((4, H1), lambda i: (0, 0)),
            ],
            out_specs=pl.BlockSpec((tile_b, NUM_ACTION), lambda i: (i, 0)),
        ),
        compiler_params=pltpu.CompilerParams(
            dimension_semantics=("parallel",)),
        cost_estimate=pl.CostEstimate(
            flops=flops, transcendentals=0, bytes_accessed=bytes_accessed),
    )(x_bf16, w_bf16, b_slab)

    return out[:batch] if padded != batch else out


def init_params(key):
    """Deterministic init mimicking PyTorch Linear default U(-1/sqrt(fan_in), +)."""
    shapes = {
        "layer1": (NUM_STATE, H1),
        "layer2": (H1, H1),
        "layer3": (H1, H2),
        "layer4": (H1, H2),
        "layer5": (H2, NUM_ACTION),
        "layer6": (H2, 1),
    }
    params = {}
    for name, (fan_in, fan_out) in shapes.items():
        key, kw, kb = jax.random.split(key, 3)
        bound = 1.0 / jnp.sqrt(fan_in)
        w = jax.random.uniform(kw, (fan_in, fan_out), jnp.float32, -bound, bound)
        b = jax.random.uniform(kb, (1, fan_out), jnp.float32, -bound, bound)
        params[name] = (w, b)
    return params


def pack_params(params):
    """Host-side packing of the 6 Linear layers into 2 slabs.

    layer3|layer4 are fused into one [64,64] plane; the head plane has the
    full dueling combine folded in, so the kernel's last dot yields Q:
        Q[:, a] = g_adv @ (w5[:, a] - mean_col(w5)) + g_sv @ w6[:, 0]
                  + (b5[a] - mean(b5) + b6)
    """
    w1, b1 = params["layer1"]
    w2, b2 = params["layer2"]
    w3, b3 = params["layer3"]
    w4, b4 = params["layer4"]
    w5, b5 = params["layer5"]
    w6, b6 = params["layer6"]

    w_slab = jnp.zeros((4, H1, H1), jnp.float32)
    w_slab = w_slab.at[0, :NUM_STATE, :].set(w1)                     # layer1
    w_slab = w_slab.at[1].set(w2)                                    # layer2
    w_slab = w_slab.at[2].set(jnp.concatenate([w3, w4], axis=1))     # layer3|layer4

    head = jnp.zeros((H1, H1), jnp.float32)
    w5_centered = w5 - jnp.mean(w5, axis=1, keepdims=True)           # [32, NA]
    head = head.at[:H2, :NUM_ACTION].set(w5_centered)                # advantage - mean
    head = head.at[H2:, :NUM_ACTION].set(
        jnp.broadcast_to(w6, (H2, NUM_ACTION)))                      # state value
    w_slab = w_slab.at[3].set(head)

    b_slab = jnp.zeros((4, H1), jnp.float32)
    b_slab = b_slab.at[0].set(b1[0])
    b_slab = b_slab.at[1].set(b2[0])
    b_slab = b_slab.at[2].set(jnp.concatenate([b3, b4], axis=1)[0])
    b_slab = b_slab.at[3, :NUM_ACTION].set(b5[0] - jnp.mean(b5) + b6[0, 0])
    return w_slab, b_slab


def _reference_forward(x, params):
    def lin(h, name):
        w, b = params[name]
        return h @ w + b
    h = jax.nn.relu(lin(x, "layer1"))
    h = jax.nn.relu(lin(h, "layer2"))
    adv = lin(jax.nn.relu(lin(h, "layer3")), "layer5")
    sv = lin(jax.nn.relu(lin(h, "layer4")), "layer6")
    return sv + adv - jnp.mean(adv, axis=1, keepdims=True)


if __name__ == "__main__":
    key = jax.random.PRNGKey(0)
    key, kx = jax.random.split(key)
    BATCH = 256   # two 128-row grid steps; shards across both v7x TensorCores
    x = jax.random.normal(kx, (BATCH, NUM_STATE), jnp.float32)
    params = init_params(key)
    w_slab, b_slab = pack_params(params)

    out = dueling_net_forward(x, w_slab, b_slab)
    out = jax.block_until_ready(out)

    ref = _reference_forward(x, params)
    assert out.shape == (BATCH, NUM_ACTION)
    # bf16 MXU operands with f32 accumulation -> loosened tolerance.
    assert jnp.allclose(out, ref, atol=5e-2, rtol=5e-2), \
        float(jnp.max(jnp.abs(out - ref)))
    print("KERNEL_OK")
</pallas_src>

<mosaic_0001>
module attributes {stable_mosaic.version = 11 : i64} {
  func.func @_dueling_kernel(%arg0: i32, %arg1: memref<128x16xbf16, #tpu.memory_space<vmem>>, %arg2: memref<4x64x64xbf16, #tpu.memory_space<vmem>>, %arg3: memref<4x64xf32, #tpu.memory_space<vmem>>, %arg4: memref<128x8xf32, #tpu.memory_space<vmem>>) attributes {dimension_semantics = [#tpu.dimension_semantics<parallel>], iteration_bounds = array<i64: 2>, scalar_prefetch = 0 : i64, scratch_operands = 0 : i64, tpu.core_type = #tpu.core_type<tc>, window_params = [{transform_indices = @transform_0, window_bounds = array<i64: 128, 16>}, {pipeline_mode = #tpu.pipeline_mode<synchronous>, transform_indices = @transform_1, window_bounds = array<i64: 4, 64, 64>}, {pipeline_mode = #tpu.pipeline_mode<synchronous>, transform_indices = @transform_2, window_bounds = array<i64: 4, 64>}, {transform_indices = @transform_3, window_bounds = array<i64: 128, 8>}]} {
    %c0 = arith.constant 0 : index
    %c0_0 = arith.constant 0 : index
    %0 = vector.load %arg1[%c0, %c0_0] : memref<128x16xbf16, #tpu.memory_space<vmem>>, vector<128x16xbf16>
    %c0_1 = arith.constant 0 : index
    %c0_2 = arith.constant 0 : index
    %c0_3 = arith.constant 0 : index
    %1 = vector.load %arg2[%c0_1, %c0_2, %c0_3] : memref<4x64x64xbf16, #tpu.memory_space<vmem>>, vector<1x16x64xbf16>
    %2 = vector.shape_cast %1 : vector<1x16x64xbf16> to vector<16x64xbf16>
    %cst = arith.constant dense<0.000000e+00> : vector<128x64xf32>
    %3 = tpu.matmul %0, %2, %cst {dimension_numbers = #tpu.dot_dimension_numbers<[1], [0], [0], [1], [0, 0, 1, 1], [], []>} : vector<128x16xbf16>, vector<16x64xbf16>, vector<128x64xf32> -> vector<128x64xf32>
    %c0_4 = arith.constant 0 : index
    %c0_5 = arith.constant 0 : index
    %4 = vector.load %arg3[%c0_4, %c0_5] : memref<4x64xf32, #tpu.memory_space<vmem>>, vector<1x64xf32>
    %5 = vector.broadcast %4 : vector<1x64xf32> to vector<128x64xf32>
    %6 = arith.addf %3, %5 : vector<128x64xf32>
    %cst_6 = arith.constant 0.000000e+00 : f32
    %7 = vector.broadcast %cst_6 : f32 to vector<128x64xf32>
    %8 = arith.maximumf %6, %7 : vector<128x64xf32>
    %9 = arith.truncf %8 : vector<128x64xf32> to vector<128x64xbf16>
    %c1 = arith.constant 1 : index
    %c0_7 = arith.constant 0 : index
    %c0_8 = arith.constant 0 : index
    %10 = vector.load %arg2[%c1, %c0_7, %c0_8] : memref<4x64x64xbf16, #tpu.memory_space<vmem>>, vector<1x64x64xbf16>
    %11 = vector.shape_cast %10 : vector<1x64x64xbf16> to vector<64x64xbf16>
    %cst_9 = arith.constant dense<0.000000e+00> : vector<128x64xf32>
    %12 = tpu.matmul %9, %11, %cst_9 {dimension_numbers = #tpu.dot_dimension_numbers<[1], [0], [0], [1], [0, 0, 1, 1], [], []>} : vector<128x64xbf16>, vector<64x64xbf16>, vector<128x64xf32> -> vector<128x64xf32>
    %c1_10 = arith.constant 1 : index
    %c0_11 = arith.constant 0 : index
    %13 = vector.load %arg3[%c1_10, %c0_11] : memref<4x64xf32, #tpu.memory_space<vmem>>, vector<1x64xf32>
    %14 = vector.broadcast %13 : vector<1x64xf32> to vector<128x64xf32>
    %15 = arith.addf %12, %14 : vector<128x64xf32>
    %cst_12 = arith.constant 0.000000e+00 : f32
    %16 = vector.broadcast %cst_12 : f32 to vector<128x64xf32>
    %17 = arith.maximumf %15, %16 : vector<128x64xf32>
    %18 = arith.truncf %17 : vector<128x64xf32> to vector<128x64xbf16>
    %c2 = arith.constant 2 : index
    %c0_13 = arith.constant 0 : index
    %c0_14 = arith.constant 0 : index
    %19 = vector.load %arg2[%c2, %c0_13, %c0_14] : memref<4x64x64xbf16, #tpu.memory_space<vmem>>, vector<1x64x64xbf16>
    %20 = vector.shape_cast %19 : vector<1x64x64xbf16> to vector<64x64xbf16>
    %cst_15 = arith.constant dense<0.000000e+00> : vector<128x64xf32>
    %21 = tpu.matmul %18, %20, %cst_15 {dimension_numbers = #tpu.dot_dimension_numbers<[1], [0], [0], [1], [0, 0, 1, 1], [], []>} : vector<128x64xbf16>, vector<64x64xbf16>, vector<128x64xf32> -> vector<128x64xf32>
    %c2_16 = arith.constant 2 : index
    %c0_17 = arith.constant 0 : index
    %22 = vector.load %arg3[%c2_16, %c0_17] : memref<4x64xf32, #tpu.memory_space<vmem>>, vector<1x64xf32>
    %23 = vector.broadcast %22 : vector<1x64xf32> to vector<128x64xf32>
    %24 = arith.addf %21, %23 : vector<128x64xf32>
    %cst_18 = arith.constant 0.000000e+00 : f32
    %25 = vector.broadcast %cst_18 : f32 to vector<128x64xf32>
    %26 = arith.maximumf %24, %25 : vector<128x64xf32>
    %27 = arith.truncf %26 : vector<128x64xf32> to vector<128x64xbf16>
    %c3 = arith.constant 3 : index
    %c0_19 = arith.constant 0 : index
    %c0_20 = arith.constant 0 : index
    %28 = vector.load %arg2[%c3, %c0_19, %c0_20] : memref<4x64x64xbf16, #tpu.memory_space<vmem>>, vector<1x64x64xbf16>
    %29 = vector.shape_cast %28 : vector<1x64x64xbf16> to vector<64x64xbf16>
    %cst_21 = arith.constant dense<0.000000e+00> : vector<128x64xf32>
    %30 = tpu.matmul %27, %29, %cst_21 {dimension_numbers = #tpu.dot_dimension_numbers<[1], [0], [0], [1], [0, 0, 1, 1], [], []>} : vector<128x64xbf16>, vector<64x64xbf16>, vector<128x64xf32> -> vector<128x64xf32>
    %31 = vector.extract_strided_slice %30 {offsets = [0, 0], sizes = [128, 8], strides = [1, 1]} : vector<128x64xf32> to vector<128x8xf32>
    %c3_22 = arith.constant 3 : index
    %c0_23 = arith.constant 0 : index
    %32 = vector.load %arg3[%c3_22, %c0_23] : memref<4x64xf32, #tpu.memory_space<vmem>>, vector<1x8xf32>
    %33 = vector.broadcast %32 : vector<1x8xf32> to vector<128x8xf32>
    %34 = arith.addf %31, %33 : vector<128x8xf32>
    %c0_24 = arith.constant 0 : index
    %c0_25 = arith.constant 0 : index
    %35 = vector.load %arg4[%c0_24, %c0_25] : memref<128x8xf32, #tpu.memory_space<vmem>>, vector<128x8xf32>
    tpu.vector_store %arg4[%c0_24, %c0_25], %34 {strides = array<i32>} : memref<128x8xf32, #tpu.memory_space<vmem>>, vector<128x8xf32>,
    return
  }
  func.func @transform_0(%arg0: i32) -> (i32, i32) {
    %c0_i32 = arith.constant 0 : i32
    %c0_i32_0 = arith.constant 0 : i32
    return %arg0, %c0_i32 : i32, i32
  }
  func.func @transform_1(%arg0: i32) -> (i32, i32, i32) {
    %c0_i32 = arith.constant 0 : i32
    %c0_i32_0 = arith.constant 0 : i32
    %c0_i32_1 = arith.constant 0 : i32
    %c0_i32_2 = arith.constant 0 : i32
    return %c0_i32, %c0_i32_0, %c0_i32_1 : i32, i32, i32
  }
  func.func @transform_2(%arg0: i32) -> (i32, i32) {
    %c0_i32 = arith.constant 0 : i32
    %c0_i32_0 = arith.constant 0 : i32
    %c0_i32_1 = arith.constant 0 : i32
    return %c0_i32, %c0_i32_0 : i32, i32
  }
  func.func @transform_3(%arg0: i32) -> (i32, i32) {
    %c0_i32 = arith.constant 0 : i32
    %c0_i32_0 = arith.constant 0 : i32
    return %arg0, %c0_i32 : i32, i32
  }
}

</mosaic_0001>

<llo_original>
// kernel: dueling_net_forward.1
$region0: #{dueling_net_forward.1}
  #allocation0 [shape = 'u32[]', space=smem, size = 0x4, offset = 0x4, fixed_abs, tag = 'smem constant byte address 0x4 - core index']
  #allocation1 [shape = 'u32[144,128]{1,0:T(1,128)}', space=vmem, size = 0x12000, scoped, tag = 'internal scratch']
  %s0 = inlined_call_operand.vmem [shape: bf16[256,16], index: 0, kind: input, shape index: {}]
  %s1 = inlined_call_operand.vmem [shape: bf16[4,64,64], index: 1, kind: input, shape index: {}]
  %s2 = inlined_call_operand.vmem [shape: f32[4,64], index: 2, kind: input, shape index: {}]
  %s3 = inlined_call_operand.vmem [shape: f32[256,8], index: 3, kind: output, shape index: {}]
  %s4 = sld [smem:[#allocation0]]
  $region45: #{dueling_net_forward.1} parent=0
    _
  %s6 = ssub.s32 1, %s4
  %s7 = scalar_select 0, %s6, %s4
  loop: start=0, step=1, limit=4
  $region2: #{dueling_net_forward.1} parent=0 // loop_pre_header
    _
  $region3: #{dueling_net_forward.1} parent=0 // loop_header
    %s9 = sphi 0, %s13
    %p10 = scmp.ge.s32.totalorder %s9, 4
    %s19 = sphi 0, %s21
    %s22 = sphi 0, %s19
    %s23 = sphi 0, %s22
    %s39 = sphi 0, %s23
    %s43 = sphi 0, %s43
    %s45 = sphi 0, %s43
    %s46 = sphi 0, %s45
    %s60 = sphi 0, %s46
    %s64 = sphi 0, %s64
    %s66 = sphi 0, %s64
    %s67 = sphi 0, %s66
    %s81 = sphi 0, %s67
    %s87 = sphi 0, %s89
    %s90 = sphi 0, %s87
    %s91 = sphi 0, %s90
    %s107 = sphi 0, %s91
  $region4: #{dueling_net_forward.1} parent=0 // loop_header_branch
    %12 = sbr.rel (%p10) target = $region8
  $region5: #{dueling_net_forward.1} parent=0 // loop_body
    %s14 = ssub.s32 %s9, 1
    %s15 = ssub.s32 %s9, 2
    %s16 = sadd.s32 %s9, 1
    %s17 = ssub.s32 %s9, %s16
    %p18 = scmp.eq.s32.totalorder %s17, 0
    %s20 = sadd.s32 %s19, 1
    %s21 = scalar_select %p18, %s19, %s20
    %p24 = pneg %p18
    %p25 = scmp.eq.s32.totalorder %s9, 1
    %p26 = por %p24, %p25
    %p27 = scmp.ne.s32.totalorder %s19, %s22
    %p28 = scmp.eq.s32.totalorder %s9, 0
    %p29 = por %p27, %p28
    %p30 = scmp.ne.s32.totalorder %s19, %s22
    %p31 = scmp.eq.s32.totalorder %s14, 1
    %p32 = por %p30, %p31
    %p33 = scmp.ne.s32.totalorder %s22, %s23
    %p34 = scmp.eq.s32.totalorder %s14, 0
    %p35 = por %p33, %p34
    %p36 = scmp.ne.s32.totalorder %s22, %s23
    %p37 = scmp.eq.s32.totalorder %s15, 1
    %p38 = por %p36, %p37
    %p40 = scmp.ne.s32.totalorder %s23, %s39
    %p41 = scmp.eq.s32.totalorder %s15, 0
    %p42 = por %p40, %p41
    %s44 = sadd.s32 %s43, 1
    %p47 = scmp.eq.s32.totalorder %s9, 1
    %p48 = scmp.ne.s32.totalorder %s43, %s45
    %p49 = scmp.eq.s32.totalorder %s9, 0
    %p50 = por %p48, %p49
    %p51 = scmp.ne.s32.totalorder %s43, %s45
    %p52 = scmp.eq.s32.totalorder %s14, 1
    %p53 = por %p51, %p52
    %p54 = scmp.ne.s32.totalorder %s45, %s46
    %p55 = scmp.eq.s32.totalorder %s14, 0
    %p56 = por %p54, %p55
    %p57 = scmp.ne.s32.totalorder %s45, %s46
    %p58 = scmp.eq.s32.totalorder %s15, 1
    %p59 = por %p57, %p58
    %p61 = scmp.ne.s32.totalorder %s46, %s60
    %p62 = scmp.eq.s32.totalorder %s15, 0
    %p63 = por %p61, %p62
    %s65 = sadd.s32 %s64, 1
    %p68 = scmp.eq.s32.totalorder %s9, 1
    %p69 = scmp.ne.s32.totalorder %s64, %s66
    %p70 = scmp.eq.s32.totalorder %s9, 0
    %p71 = por %p69, %p70
    %p72 = scmp.ne.s32.totalorder %s64, %s66
    %p73 = scmp.eq.s32.totalorder %s14, 1
    %p74 = por %p72, %p73
    %p75 = scmp.ne.s32.totalorder %s66, %s67
    %p76 = scmp.eq.s32.totalorder %s14, 0
    %p77 = por %p75, %p76
    %p78 = scmp.ne.s32.totalorder %s66, %s67
    %p79 = scmp.eq.s32.totalorder %s15, 1
    %p80 = por %p78, %p79
    %p82 = scmp.ne.s32.totalorder %s67, %s81
    %p83 = scmp.eq.s32.totalorder %s15, 0
    %p84 = por %p82, %p83
    %s85 = ssub.s32 %s9, %s16
    %p86 = scmp.eq.s32.totalorder %s85, 0
    %s88 = sadd.s32 %s87, 1
    %s89 = scalar_select %p86, %s87, %s88
    %p92 = pneg %p86
    %p93 = scmp.eq.s32.totalorder %s9, 1
    %p94 = por %p92, %p93
    %p95 = scmp.ne.s32.totalorder %s87, %s90
    %p96 = scmp.eq.s32.totalorder %s9, 0
    %p97 = por %p95, %p96
    %p98 = scmp.ne.s32.totalorder %s87, %s90
    %p99 = scmp.eq.s32.totalorder %s14, 1
    %p100 = por %p98, %p99
    %p101 = scmp.ne.s32.totalorder %s90, %s91
    %p102 = scmp.eq.s32.totalorder %s14, 0
    %p103 = por %p101, %p102
    %p104 = scmp.ne.s32.totalorder %s90, %s91
    %p105 = scmp.eq.s32.totalorder %s15, 1
    %p106 = por %p104, %p105
    %p108 = scmp.ne.s32.totalorder %s91, %s107
    %p109 = scmp.eq.s32.totalorder %s15, 0
    %p110 = por %p108, %p109
    %p111 = scmp.le.s32.totalorder 1, %s9
    %p112 = scmp.lt.s32.totalorder %s9, 3
    %p113 = pnand %p111, %p112
    %p114 = pneg %p113
    // Predicated region
    $region9: #{dueling_net_forward.1} parent=5 // pred_check
      _
    $region10: #{dueling_net_forward.1} parent=5 // pred_check_branch
      %116 = sbr.rel (%p113) target = $region12
    $region11: #{dueling_net_forward.1} parent=5 // pred_region
      %s117 = ssub.s32 %s9, 1
      // Predicated region
      $region13: #{dueling_net_forward.1} parent=11 // pred_check
        %p118 = pneg %p56
      $region14: #{dueling_net_forward.1} parent=11 // pred_check_branch
        %120 = sbr.rel (%p118) target = $region16
      $region15: #{dueling_net_forward.1} parent=11 // pred_region
        _
      $region16: #{dueling_net_forward.1} parent=11 // pred_fallthru
        _
      // Predicated region
      $region17: #{dueling_net_forward.1} parent=11 // pred_check
        %p121 = pneg %p77
      $region18: #{dueling_net_forward.1} parent=11 // pred_check_branch
        %123 = sbr.rel (%p121) target = $region20
      $region19: #{dueling_net_forward.1} parent=11 // pred_region
        _
      $region20: #{dueling_net_forward.1} parent=11 // pred_fallthru
        _
    $region12: #{dueling_net_forward.1} parent=5 // pred_fallthru
      _
    %p124 = scmp.lt.s32.totalorder %s9, 2
    // Predicated region
    $region21: #{dueling_net_forward.1} parent=5 // pred_check
      %p125 = pneg %p124
    $region22: #{dueling_net_forward.1} parent=5 // pred_check_branch
      %127 = sbr.rel (%p125) target = $region24
    $region23: #{dueling_net_forward.1} parent=5 // pred_region
      // Predicated region
      $region25: #{dueling_net_forward.1} parent=23 // pred_check
        %p128 = pneg %p29
      $region26: #{dueling_net_forward.1} parent=23 // pred_check_branch
        %130 = sbr.rel (%p128) target = $region28
      $region27: #{dueling_net_forward.1} parent=23 // pred_region
        %s131 = smul.u32 16, %s9
        %p132 = scmp.lt.s32.totalorder %s131, 31
        %s133 = scalar_select %p132, %s131, 31
        %s134 = smul.addr %s133, 4
        %s135 = scalar_lea.vmem %s0, %s134
        %s136 = smul.u32 16, %s9
      $region28: #{dueling_net_forward.1} parent=23 // pred_fallthru
        _
    $region24: #{dueling_net_forward.1} parent=5 // pred_fallthru
      _
    %p137 = scmp.le.s32.totalorder 1, %s9
    %p138 = scmp.lt.s32.totalorder %s9, 3
    %p139 = pnand %p137, %p138
    %p140 = pneg %p139
    // Predicated region
    $region29: #{dueling_net_forward.1} parent=5 // pred_check
      _
    $region30: #{dueling_net_forward.1} parent=5 // pred_check_branch
      %142 = sbr.rel (%p139) target = $region32
    $region31: #{dueling_net_forward.1} parent=5 // pred_region
      %s143 = ssub.s32 %s9, 1
      %s144 = smul.u32 16, %s14
      %p145 = scmp.lt.s32.totalorder %s144, 31
      %s146 = scalar_select %p145, %s144, 31
      %s147 = smul.addr %s146, 4
      %s148 = scalar_lea.vmem %s0, %s147
      %p149 = pneg %p35
      %p150 = pneg %p32
      %p151 = pneg %p56
      %p152 = pneg %p53
      %p153 = pneg %p77
      %p154 = pneg %p74
      %p155 = pneg %p103
      %p156 = pneg %p100
      %s157 = smul.u32 16, %s14
      %p158 = scmp.lt.s32.totalorder %s157, 31
      %s159 = scalar_select %p158, %s157, 31
      %s160 = smul.addr %s159, 8
      %s161 = scalar_lea.vmem %s3, %s160
      %s162 = smul.u32 16, %s14
      %p163 = scmp.lt.s32.totalorder %s162, 31
      %s164 = scalar_select %p163, %s162, 31
      %s165 = smul.addr %s164, 4
      %s166 = scalar_lea.vmem %s0, %s165
      %s167 = smul.u32 16, %s14
      %s168 = smul.u32 16, %s14
      %p169 = scmp.lt.s32.totalorder %s168, 31
      %s170 = scalar_select %p169, %s168, 31
      %s171 = smul.addr %s170, 8
      %s172 = scalar_lea.vmem %s3, %s171
      %s173 = smul.u32 16, %s14
      %v175 = vld [vmem:[%s166] sm:$0xf]
      %v176 = vld [vmem:[%s166 + $0x4] sm:$0xf]
      %v177 = vld [vmem:[%s166 + $0x8] sm:$0xf]
      %v178 = vld [vmem:[%s166 + $0xc] sm:$0xf]
      %v179 = vld [vmem:[%s166 + $0x10] sm:$0xf]
      %v180 = vld [vmem:[%s166 + $0x14] sm:$0xf]
      %v181 = vld [vmem:[%s166 + $0x18] sm:$0xf]
      %v182 = vld [vmem:[%s166 + $0x1c] sm:$0xf]
      %v183 = vld [vmem:[%s166 + $0x20] sm:$0xf]
      %v184 = vld [vmem:[%s166 + $0x24] sm:$0xf]
      %v185 = vld [vmem:[%s166 + $0x28] sm:$0xf]
      %v186 = vld [vmem:[%s166 + $0x2c] sm:$0xf]
      %v187 = vld [vmem:[%s166 + $0x30] sm:$0xf]
      %v188 = vld [vmem:[%s166 + $0x34] sm:$0xf]
      %v189 = vld [vmem:[%s166 + $0x38] sm:$0xf]
      %v190 = vld [vmem:[%s166 + $0x3c] sm:$0xf]
      %v191 = vld [vmem:[%s1] sm:$0xf]
      %v192 = vld [vmem:[%s1 + $0x4] sm:$0xf]
      %v193 = vld [vmem:[%s2] sm:$0x1]
      %v194 = vlaneseq
      %v195 = vshrl.u32 %v194, 7
      %v196 = vsub.s32 0, %v195
      %v197 = vrot.slane %v193, %v196
      %v214 = vunpack.c.l.b16 %v175
      %v215 = vunpack.c.l.b16 %v176
      %v216 = vunpack.c.l.b16 %v177
      %v217 = vunpack.c.l.b16 %v178
      %v218 = vunpack.c.l.b16 %v179
      %v219 = vunpack.c.l.b16 %v180
      %v220 = vunpack.c.l.b16 %v181
      %v221 = vunpack.c.l.b16 %v182
      %v222 = vunpack.c.l.b16 %v183
      %v223 = vunpack.c.l.b16 %v184
      %v224 = vunpack.c.l.b16 %v185
      %v225 = vunpack.c.l.b16 %v186
      %v226 = vunpack.c.l.b16 %v187
      %v227 = vunpack.c.l.b16 %v188
      %v228 = vunpack.c.l.b16 %v189
      %v229 = vunpack.c.l.b16 %v190
      %v230 = vpack.c.b16 %v215, %v214
      %v231 = vpack.c.b16 %v217, %v216
      %v232 = vpack.c.b16 %v219, %v218
      %v233 = vpack.c.b16 %v221, %v220
      %v234 = vpack.c.b16 %v223, %v222
      %v235 = vpack.c.b16 %v225, %v224
      %v236 = vpack.c.b16 %v227, %v226
      %v237 = vpack.c.b16 %v229, %v228
      %v240 = vunpack.c.l.b16 %v191
      %v241 = vunpack.c.l.b16 %v192
      %v242 = vpack.c.b16 %v241, %v240
      %vm244 = vcmask 130048
      %v246 = vsel %vm244, %v230, 0
      %v249 = vsel %vm244, %v231, 0
      %v252 = vsel %vm244, %v232, 0
      %v255 = vsel %vm244, %v233, 0
      %v258 = vsel %vm244, %v234, 0
      %v261 = vsel %vm244, %v235, 0
      %v264 = vsel %vm244, %v236, 0
      %v267 = vsel %vm244, %v237, 0
      %269 = vmatprep.subr.bf16.mxu0 0
      %270 = vmatpush1.bf16.msra.mxu0 %v242
      %271 = vmatprep.subr.bf16.mxu0 0
      %272 = vmatpush1.bf16.msra.mxu0 0
      %273 = vmatprep.subr.bf16.mxu0 0
      %274 = vmatpush1.bf16.msra.mxu0 0
      %275 = vmatprep.subr.bf16.mxu0 0
      %276 = vmatpush1.bf16.msra.mxu0 0
      %277 = vmatprep.subr.bf16.mxu0 0
      %278 = vmatpush1.bf16.msra.mxu0 0
      %279 = vmatprep.subr.bf16.mxu0 0
      %280 = vmatpush1.bf16.msra.mxu0 0
      %281 = vmatprep.subr.bf16.mxu0 0
      %282 = vmatpush1.bf16.msra.mxu0 0
      %283 = vmatprep.subr.bf16.mxu0 0
      %284 = vmatpush1.bf16.msra.mxu0 0
      %285 = vmatprep.subr.bf16.mxu0 0
      %286 = vmatpush1.bf16.msra.mxu0 0
      %287 = vmatprep.subr.bf16.mxu0 0
      %288 = vmatpush1.bf16.msra.mxu0 0
      %289 = vmatprep.subr.bf16.mxu0 0
      %290 = vmatpush1.bf16.msra.mxu0 0
      %291 = vmatprep.subr.bf16.mxu0 0
      %292 = vmatpush1.bf16.msra.mxu0 0
      %293 = vmatprep.subr.bf16.mxu0 0
      %294 = vmatpush1.bf16.msra.mxu0 0
      %295 = vmatprep.subr.bf16.mxu0 0
      %296 = vmatpush1.bf16.msra.mxu0 0
      %297 = vmatprep.subr.bf16.mxu0 0
      %298 = vmatpush1.bf16.msra.mxu0 0
      %299 = vmatprep.subr.bf16.mxu0 0
      %300 = vmatpush1.bf16.msra.mxu0 0
      %301 = vmatprep.mubr.bf16.mxu0 0
      %302 = vmatmul.mubr.bf16.gmra.mrb[0].mxu0 %v246
      %v303 = vpop.f32.mrb[0].mxu0
      %v304 = vadd.f32 %v197, %v303
      %v305 = vpop.f32.mrb[0].mxu0
      %v306 = vpop.f32.mrb[0].mxu0
      %v307 = vadd.f32 %v197, %v306
      %v308 = vpop.f32.mrb[0].mxu0
      %309 = vmatprep.mubr.bf16.mxu0 0
      %310 = vmatmul.mubr.bf16.gmra.mrb[0].mxu0 %v249
      %v311 = vpop.f32.mrb[0].mxu0
      %v312 = vadd.f32 %v197, %v311
      %v313 = vpop.f32.mrb[0].mxu0
      %v314 = vpop.f32.mrb[0].mxu0
      %v315 = vadd.f32 %v197, %v314
      %v316 = vpop.f32.mrb[0].mxu0
      %317 = vmatprep.mubr.bf16.mxu0 0
      %318 = vmatmul.mubr.bf16.gmra.mrb[0].mxu0 %v252
      %v319 = vpop.f32.mrb[0].mxu0
      %v320 = vadd.f32 %v197, %v319
      %v321 = vpop.f32.mrb[0].mxu0
      %v322 = vpop.f32.mrb[0].mxu0
      %v323 = vadd.f32 %v197, %v322
      %v324 = vpop.f32.mrb[0].mxu0
      %325 = vmatprep.mubr.bf16.mxu0 0
      %326 = vmatmul.mubr.bf16.gmra.mrb[0].mxu0 %v255
      %v327 = vpop.f32.mrb[0].mxu0
      %v328 = vadd.f32 %v197, %v327
      %v329 = vpop.f32.mrb[0].mxu0
      %v330 = vpop.f32.mrb[0].mxu0
      %v331 = vadd.f32 %v197, %v330
      %v332 = vpop.f32.mrb[0].mxu0
      %333 = vmatprep.mubr.bf16.mxu0 0
      %334 = vmatmul.mubr.bf16.gmra.mrb[0].mxu0 %v258
      %v335 = vpop.f32.mrb[0].mxu0
      %v336 = vadd.f32 %v197, %v335
      %v337 = vpop.f32.mrb[0].mxu0
      %v338 = vpop.f32.mrb[0].mxu0
      %v339 = vadd.f32 %v197, %v338
      %v340 = vpop.f32.mrb[0].mxu0
      %341 = vmatprep.mubr.bf16.mxu0 0
      %342 = vmatmul.mubr.bf16.gmra.mrb[0].mxu0 %v261
      %v343 = vpop.f32.mrb[0].mxu0
      %v344 = vadd.f32 %v197, %v343
      %v345 = vpop.f32.mrb[0].mxu0
      %v346 = vpop.f32.mrb[0].mxu0
      %v347 = vadd.f32 %v197, %v346
      %v348 = vpop.f32.mrb[0].mxu0
      %349 = vmatprep.mubr.bf16.mxu0 0
      %350 = vmatmul.mubr.bf16.gmra.mrb[0].mxu0 %v264
      %v351 = vpop.f32.mrb[0].mxu0
      %v352 = vadd.f32 %v197, %v351
      %v353 = vpop.f32.mrb[0].mxu0
      %v354 = vpop.f32.mrb[0].mxu0
      %v355 = vadd.f32 %v197, %v354
      %v356 = vpop.f32.mrb[0].mxu0
      %357 = vmatprep.mubr.bf16.mxu0 0
      %358 = vmatmul.mubr.bf16.gmra.mrb[0].mxu0 %v267
      %v359 = vpop.f32.mrb[0].mxu0
      %v360 = vadd.f32 %v197, %v359
      %v361 = vpop.f32.mrb[0].mxu0
      %v362 = vpop.f32.mrb[0].mxu0
      %v363 = vadd.f32 %v197, %v362
      %v364 = vpop.f32.mrb[0].mxu0
      %365 = vdwg.mxu0
      %v366 = vmax.f32 %v304, 0.0
      %v367 = vmax.f32 %v307, 0.0
      %v368 = vmax.f32 %v312, 0.0
      %v369 = vmax.f32 %v315, 0.0
      %v370 = vmax.f32 %v320, 0.0
      %v371 = vmax.f32 %v323, 0.0
      %v372 = vmax.f32 %v328, 0.0
      %v373 = vmax.f32 %v331, 0.0
      %v374 = vmax.f32 %v336, 0.0
      %v375 = vmax.f32 %v339, 0.0
      %v376 = vmax.f32 %v344, 0.0
      %v377 = vmax.f32 %v347, 0.0
      %v378 = vmax.f32 %v352, 0.0
      %v379 = vmax.f32 %v355, 0.0
      %v380 = vmax.f32 %v360, 0.0
      %v381 = vmax.f32 %v363, 0.0
      %v382 = vpack.c.bf16 %v367, %v366
      %v383 = vpack.c.bf16 %v369, %v368
      %v384 = vpack.c.bf16 %v371, %v370
      %v385 = vpack.c.bf16 %v373, %v372
      %v386 = vpack.c.bf16 %v375, %v374
      %v387 = vpack.c.bf16 %v377, %v376
      %v388 = vpack.c.bf16 %v379, %v378
      %v389 = vpack.c.bf16 %v381, %v380
      %s390 = scalar_lea.vmem %s1, 32
      %v391 = vld [vmem:[%s390] sm:$0xf]
      %v392 = vld [vmem:[%s390 + $0x4] sm:$0xf]
      %v393 = vld [vmem:[%s390 + $0x8] sm:$0xf]
      %v394 = vld [vmem:[%s390 + $0xc] sm:$0xf]
      %v395 = vld [vmem:[%s390 + $0x10] sm:$0xf]
      %v396 = vld [vmem:[%s390 + $0x14] sm:$0xf]
      %v397 = vld [vmem:[%s390 + $0x18] sm:$0xf]
      %v398 = vld [vmem:[%s390 + $0x1c] sm:$0xf]
      %v399 = vld [vmem:[%s2 + $0x1] sm:$0x1]
      %v400 = vlaneseq
      %v401 = vshrl.u32 %v400, 7
      %v402 = vsub.s32 0, %v401
      %v403 = vrot.slane %v399, %v402
      %v412 = vunpack.c.l.b16 %v391
      %v413 = vunpack.c.l.b16 %v392
      %v414 = vunpack.c.l.b16 %v393
      %v415 = vunpack.c.l.b16 %v394
      %v416 = vunpack.c.l.b16 %v395
      %v417 = vunpack.c.l.b16 %v396
      %v418 = vunpack.c.l.b16 %v397
      %v419 = vunpack.c.l.b16 %v398
      %v420 = vpack.c.b16 %v413, %v412
      %v421 = vpack.c.b16 %v415, %v414
      %v422 = vpack.c.b16 %v417, %v416
      %v423 = vpack.c.b16 %v419, %v418
      %vm428 = vcmask 523264
      %v430 = vsel %vm428, %v382, 0
      %v433 = vsel %vm428, %v383, 0
      %v436 = vsel %vm428, %v384, 0
      %v439 = vsel %vm428, %v385, 0
      %v442 = vsel %vm428, %v386, 0
      %v445 = vsel %vm428, %v387, 0
      %v448 = vsel %vm428, %v388, 0
      %v451 = vsel %vm428, %v389, 0
      %453 = vmatprep.subr.bf16.mxu0 0
      %454 = vmatpush1.bf16.msra.mxu0 %v420
      %455 = vmatprep.subr.bf16.mxu0 0
      %456 = vmatpush1.bf16.msra.mxu0 %v421
      %457 = vmatprep.subr.bf16.mxu0 0
      %458 = vmatpush1.bf16.msra.mxu0 %v422
      %459 = vmatprep.subr.bf16.mxu0 0
      %460 = vmatpush1.bf16.msra.mxu0 %v423
      %461 = vmatprep.subr.bf16.mxu0 0
      %462 = vmatpush1.bf16.msra.mxu0 0
      %463 = vmatprep.subr.bf16.mxu0 0
      %464 = vmatpush1.bf16.msra.mxu0 0
      %465 = vmatprep.subr.bf16.mxu0 0
      %466 = vmatpush1.bf16.msra.mxu0 0
      %467 = vmatprep.subr.bf16.mxu0 0
      %468 = vmatpush1.bf16.msra.mxu0 0
      %469 = vmatprep.subr.bf16.mxu0 0
      %470 = vmatpush1.bf16.msra.mxu0 0
      %471 = vmatprep.subr.bf16.mxu0 0
      %472 = vmatpush1.bf16.msra.mxu0 0
      %473 = vmatprep.subr.bf16.mxu0 0
      %474 = vmatpush1.bf16.msra.mxu0 0
      %475 = vmatprep.subr.bf16.mxu0 0
      %476 = vmatpush1.bf16.msra.mxu0 0
      %477 = vmatprep.subr.bf16.mxu0 0
      %478 = vmatpush1.bf16.msra.mxu0 0
      %479 = vmatprep.subr.bf16.mxu0 0
      %480 = vmatpush1.bf16.msra.mxu0 0
      %481 = vmatprep.subr.bf16.mxu0 0
      %482 = vmatpush1.bf16.msra.mxu0 0
      %483 = vmatprep.subr.bf16.mxu0 0
      %484 = vmatpush1.bf16.msra.mxu0 0
      %485 = vmatprep.mubr.bf16.mxu0 0
      %486 = vmatmul.mubr.bf16.gmra.mrb[0].mxu0 %v430
      %v487 = vpop.f32.mrb[0].mxu0
      %v488 = vadd.f32 %v403, %v487
      %v489 = vpop.f32.mrb[0].mxu0
      %v490 = vpop.f32.mrb[0].mxu0
      %v491 = vadd.f32 %v403, %v490
      %v492 = vpop.f32.mrb[0].mxu0
      %493 = vmatprep.mubr.bf16.mxu0 0
      %494 = vmatmul.mubr.bf16.gmra.mrb[0].mxu0 %v433
      %v495 = vpop.f32.mrb[0].mxu0
      %v496 = vadd.f32 %v403, %v495
      %v497 = vpop.f32.mrb[0].mxu0
      %v498 = vpop.f32.mrb[0].mxu0
      %v499 = vadd.f32 %v403, %v498
      %v500 = vpop.f32.mrb[0].mxu0
      %501 = vmatprep.mubr.bf16.mxu0 0
      %502 = vmatmul.mubr.bf16.gmra.mrb[0].mxu0 %v436
      %v503 = vpop.f32.mrb[0].mxu0
      %v504 = vadd.f32 %v403, %v503
      %v505 = vpop.f32.mrb[0].mxu0
      %v506 = vpop.f32.mrb[0].mxu0
      %v507 = vadd.f32 %v403, %v506
      %v508 = vpop.f32.mrb[0].mxu0
      %509 = vmatprep.mubr.bf16.mxu0 0
      %510 = vmatmul.mubr.bf16.gmra.mrb[0].mxu0 %v439
      %v511 = vpop.f32.mrb[0].mxu0
      %v512 = vadd.f32 %v403, %v511
      %v513 = vpop.f32.mrb[0].mxu0
      %v514 = vpop.f32.mrb[0].mxu0
      %v515 = vadd.f32 %v403, %v514
      %v516 = vpop.f32.mrb[0].mxu0
      %517 = vmatprep.mubr.bf16.mxu0 0
      %518 = vmatmul.mubr.bf16.gmra.mrb[0].mxu0 %v442
      %v519 = vpop.f32.mrb[0].mxu0
      %v520 = vadd.f32 %v403, %v519
      %v521 = vpop.f32.mrb[0].mxu0
      %v522 = vpop.f32.mrb[0].mxu0
      %v523 = vadd.f32 %v403, %v522
      %v524 = vpop.f32.mrb[0].mxu0
      %525 = vmatprep.mubr.bf16.mxu0 0
      %526 = vmatmul.mubr.bf16.gmra.mrb[0].mxu0 %v445
      %v527 = vpop.f32.mrb[0].mxu0
      %v528 = vadd.f32 %v403, %v527
      %v529 = vpop.f32.mrb[0].mxu0
      %v530 = vpop.f32.mrb[0].mxu0
      %v531 = vadd.f32 %v403, %v530
      %v532 = vpop.f32.mrb[0].mxu0
      %533 = vmatprep.mubr.bf16.mxu0 0
      %534 = vmatmul.mubr.bf16.gmra.mrb[0].mxu0 %v448
      %v535 = vpop.f32.mrb[0].mxu0
      %v536 = vadd.f32 %v403, %v535
      %v537 = vpop.f32.mrb[0].mxu0
      %v538 = vpop.f32.mrb[0].mxu0
      %v539 = vadd.f32 %v403, %v538
      %v540 = vpop.f32.mrb[0].mxu0
      %541 = vmatprep.mubr.bf16.mxu0 0
      %542 = vmatmul.mubr.bf16.gmra.mrb[0].mxu0 %v451
      %v543 = vpop.f32.mrb[0].mxu0
      %v544 = vadd.f32 %v403, %v543
      %v545 = vpop.f32.mrb[0].mxu0
      %v546 = vpop.f32.mrb[0].mxu0
      %v547 = vadd.f32 %v403, %v546
      %v548 = vpop.f32.mrb[0].mxu0
      %549 = vdwg.mxu0
      %v550 = vmax.f32 %v488, 0.0
      %v551 = vmax.f32 %v491, 0.0
      %v552 = vmax.f32 %v496, 0.0
      %v553 = vmax.f32 %v499, 0.0
      %v554 = vmax.f32 %v504, 0.0
      %v555 = vmax.f32 %v507, 0.0
      %v556 = vmax.f32 %v512, 0.0
      %v557 = vmax.f32 %v515, 0.0
      %v558 = vmax.f32 %v520, 0.0
      %v559 = vmax.f32 %v523, 0.0
      %v560 = vmax.f32 %v528, 0.0
      %v561 = vmax.f32 %v531, 0.0
      %v562 = vmax.f32 %v536, 0.0
      %v563 = vmax.f32 %v539, 0.0
      %v564 = vmax.f32 %v544, 0.0
      %v565 = vmax.f32 %v547, 0.0
      %v566 = vpack.c.bf16 %v551, %v550
      %v567 = vpack.c.bf16 %v553, %v552
      %v568 = vpack.c.bf16 %v555, %v554
      %v569 = vpack.c.bf16 %v557, %v556
      %v570 = vpack.c.bf16 %v559, %v558
      %v571 = vpack.c.bf16 %v561, %v560
      %v572 = vpack.c.bf16 %v563, %v562
      %v573 = vpack.c.bf16 %v565, %v564
      %s574 = scalar_lea.vmem %s1, 64
      %v575 = vld [vmem:[%s574] sm:$0xf]
      %v576 = vld [vmem:[%s574 + $0x4] sm:$0xf]
      %v577 = vld [vmem:[%s574 + $0x8] sm:$0xf]
      %v578 = vld [vmem:[%s574 + $0xc] sm:$0xf]
      %v579 = vld [vmem:[%s574 + $0x10] sm:$0xf]
      %v580 = vld [vmem:[%s574 + $0x14] sm:$0xf]
      %v581 = vld [vmem:[%s574 + $0x18] sm:$0xf]
      %v582 = vld [vmem:[%s574 + $0x1c] sm:$0xf]
      %v583 = vld [vmem:[%s2 + $0x2] sm:$0x1]
      %v584 = vlaneseq
      %v585 = vshrl.u32 %v584, 7
      %v586 = vsub.s32 0, %v585
      %v587 = vrot.slane %v583, %v586
      %v596 = vunpack.c.l.b16 %v575
      %v597 = vunpack.c.l.b16 %v576
      %v598 = vunpack.c.l.b16 %v577
      %v599 = vunpack.c.l.b16 %v578
      %v600 = vunpack.c.l.b16 %v579
      %v601 = vunpack.c.l.b16 %v580
      %v602 = vunpack.c.l.b16 %v581
      %v603 = vunpack.c.l.b16 %v582
      %v604 = vpack.c.b16 %v597, %v596
      %v605 = vpack.c.b16 %v599, %v598
      %v606 = vpack.c.b16 %v601, %v600
      %v607 = vpack.c.b16 %v603, %v602
      %v613 = vsel %vm428, %v566, 0
      %v616 = vsel %vm428, %v567, 0
      %v619 = vsel %vm428, %v568, 0
      %v622 = vsel %vm428, %v569, 0
      %v625 = vsel %vm428, %v570, 0
      %v628 = vsel %vm428, %v571, 0
      %v631 = vsel %vm428, %v572, 0
      %v634 = vsel %vm428, %v573, 0
      %636 = vmatprep.subr.bf16.mxu0 0
      %637 = vmatpush1.bf16.msra.mxu0 %v604
      %638 = vmatprep.subr.bf16.mxu0 0
      %639 = vmatpush1.bf16.msra.mxu0 %v605
      %640 = vmatprep.subr.bf16.mxu0 0
      %641 = vmatpush1.bf16.msra.mxu0 %v606
      %642 = vmatprep.subr.bf16.mxu0 0
      %643 = vmatpush1.bf16.msra.mxu0 %v607
      %644 = vmatprep.subr.bf16.mxu0 0
      %645 = vmatpush1.bf16.msra.mxu0 0
      %646 = vmatprep.subr.bf16.mxu0 0
      %647 = vmatpush1.bf16.msra.mxu0 0
      %648 = vmatprep.subr.bf16.mxu0 0
      %649 = vmatpush1.bf16.msra.mxu0 0
      %650 = vmatprep.subr.bf16.mxu0 0
      %651 = vmatpush1.bf16.msra.mxu0 0
      %652 = vmatprep.subr.bf16.mxu0 0
      %653 = vmatpush1.bf16.msra.mxu0 0
      %654 = vmatprep.subr.bf16.mxu0 0
      %655 = vmatpush1.bf16.msra.mxu0 0
      %656 = vmatprep.subr.bf16.mxu0 0
      %657 = vmatpush1.bf16.msra.mxu0 0
      %658 = vmatprep.subr.bf16.mxu0 0
      %659 = vmatpush1.bf16.msra.mxu0 0
      %660 = vmatprep.subr.bf16.mxu0 0
      %661 = vmatpush1.bf16.msra.mxu0 0
      %662 = vmatprep.subr.bf16.mxu0 0
      %663 = vmatpush1.bf16.msra.mxu0 0
      %664 = vmatprep.subr.bf16.mxu0 0
      %665 = vmatpush1.bf16.msra.mxu0 0
      %666 = vmatprep.subr.bf16.mxu0 0
      %667 = vmatpush1.bf16.msra.mxu0 0
      %668 = vmatprep.mubr.bf16.mxu0 0
      %669 = vmatmul.mubr.bf16.gmra.mrb[0].mxu0 %v613
      %v670 = vpop.f32.mrb[0].mxu0
      %v671 = vadd.f32 %v587, %v670
      %v672 = vpop.f32.mrb[0].mxu0
      %v673 = vpop.f32.mrb[0].mxu0
      %v674 = vadd.f32 %v587, %v673
      %v675 = vpop.f32.mrb[0].mxu0
      %676 = vmatprep.mubr.bf16.mxu0 0
      %677 = vmatmul.mubr.bf16.gmra.mrb[0].mxu0 %v616
      %v678 = vpop.f32.mrb[0].mxu0
      %v679 = vadd.f32 %v587, %v678
      %v680 = vpop.f32.mrb[0].mxu0
      %v681 = vpop.f32.mrb[0].mxu0
      %v682 = vadd.f32 %v587, %v681
      %v683 = vpop.f32.mrb[0].mxu0
      %684 = vmatprep.mubr.bf16.mxu0 0
      %685 = vmatmul.mubr.bf16.gmra.mrb[0].mxu0 %v619
      %v686 = vpop.f32.mrb[0].mxu0
      %v687 = vadd.f32 %v587, %v686
      %v688 = vpop.f32.mrb[0].mxu0
      %v689 = vpop.f32.mrb[0].mxu0
      %v690 = vadd.f32 %v587, %v689
      %v691 = vpop.f32.mrb[0].mxu0
      %692 = vmatprep.mubr.bf16.mxu0 0
      %693 = vmatmul.mubr.bf16.gmra.mrb[0].mxu0 %v622
      %v694 = vpop.f32.mrb[0].mxu0
      %v695 = vadd.f32 %v587, %v694
      %v696 = vpop.f32.mrb[0].mxu0
      %v697 = vpop.f32.mrb[0].mxu0
      %v698 = vadd.f32 %v587, %v697
      %v699 = vpop.f32.mrb[0].mxu0
      %700 = vmatprep.mubr.bf16.mxu0 0
      %701 = vmatmul.mubr.bf16.gmra.mrb[0].mxu0 %v625
      %v702 = vpop.f32.mrb[0].mxu0
      %v703 = vadd.f32 %v587, %v702
      %v704 = vpop.f32.mrb[0].mxu0
      %v705 = vpop.f32.mrb[0].mxu0
      %v706 = vadd.f32 %v587, %v705
      %v707 = vpop.f32.mrb[0].mxu0
      %708 = vmatprep.mubr.bf16.mxu0 0
      %709 = vmatmul.mubr.bf16.gmra.mrb[0].mxu0 %v628
      %v710 = vpop.f32.mrb[0].mxu0
      %v711 = vadd.f32 %v587, %v710
      %v712 = vpop.f32.mrb[0].mxu0
      %v713 = vpop.f32.mrb[0].mxu0
      %v714 = vadd.f32 %v587, %v713
      %v715 = vpop.f32.mrb[0].mxu0
      %716 = vmatprep.mubr.bf16.mxu0 0
      %717 = vmatmul.mubr.bf16.gmra.mrb[0].mxu0 %v631
      %v718 = vpop.f32.mrb[0].mxu0
      %v719 = vadd.f32 %v587, %v718
      %v720 = vpop.f32.mrb[0].mxu0
      %v721 = vpop.f32.mrb[0].mxu0
      %v722 = vadd.f32 %v587, %v721
      %v723 = vpop.f32.mrb[0].mxu0
      %724 = vmatprep.mubr.bf16.mxu0 0
      %725 = vmatmul.mubr.bf16.gmra.mrb[0].mxu0 %v634
      %v726 = vpop.f32.mrb[0].mxu0
      %v727 = vadd.f32 %v587, %v726
      %v728 = vpop.f32.mrb[0].mxu0
      %v729 = vpop.f32.mrb[0].mxu0
      %v730 = vadd.f32 %v587, %v729
      %v731 = vpop.f32.mrb[0].mxu0
      %732 = vdwg.mxu0
      %v733 = vmax.f32 %v671, 0.0
      %v734 = vmax.f32 %v674, 0.0
      %v735 = vmax.f32 %v679, 0.0
      %v736 = vmax.f32 %v682, 0.0
      %v737 = vmax.f32 %v687, 0.0
      %v738 = vmax.f32 %v690, 0.0
      %v739 = vmax.f32 %v695, 0.0
      %v740 = vmax.f32 %v698, 0.0
      %v741 = vmax.f32 %v703, 0.0
      %v742 = vmax.f32 %v706, 0.0
      %v743 = vmax.f32 %v711, 0.0
      %v744 = vmax.f32 %v714, 0.0
      %v745 = vmax.f32 %v719, 0.0
      %v746 = vmax.f32 %v722, 0.0
      %v747 = vmax.f32 %v727, 0.0
      %v748 = vmax.f32 %v730, 0.0
      %v749 = vpack.c.bf16 %v734, %v733
      %v750 = vpack.c.bf16 %v736, %v735
      %v751 = vpack.c.bf16 %v738, %v737
      %v752 = vpack.c.bf16 %v740, %v739
      %v753 = vpack.c.bf16 %v742, %v741
      %v754 = vpack.c.bf16 %v744, %v743
      %v755 = vpack.c.bf16 %v746, %v745
      %v756 = vpack.c.bf16 %v748, %v747
      %s757 = scalar_lea.vmem %s1, 96
      %v758 = vld [vmem:[%s757] sm:$0xf]
      %v759 = vld [vmem:[%s757 + $0x4] sm:$0xf]
      %v760 = vld [vmem:[%s757 + $0x8] sm:$0xf]
      %v761 = vld [vmem:[%s757 + $0xc] sm:$0xf]
      %v762 = vld [vmem:[%s757 + $0x10] sm:$0xf]
      %v763 = vld [vmem:[%s757 + $0x14] sm:$0xf]
      %v764 = vld [vmem:[%s757 + $0x18] sm:$0xf]
      %v765 = vld [vmem:[%s757 + $0x1c] sm:$0xf]
      %v774 = vunpack.c.l.b16 %v758
      %v775 = vunpack.c.l.b16 %v759
      %v776 = vunpack.c.l.b16 %v760
      %v777 = vunpack.c.l.b16 %v761
      %v778 = vunpack.c.l.b16 %v762
      %v779 = vunpack.c.l.b16 %v763
      %v780 = vunpack.c.l.b16 %v764
      %v781 = vunpack.c.l.b16 %v765
      %v782 = vpack.c.b16 %v775, %v774
      %v783 = vpack.c.b16 %v777, %v776
      %v784 = vpack.c.b16 %v779, %v778
      %v785 = vpack.c.b16 %v781, %v780
      %v791 = vsel %vm428, %v749, 0
      %v794 = vsel %vm428, %v750, 0
      %v797 = vsel %vm428, %v751, 0
      %v800 = vsel %vm428, %v752, 0
      %v803 = vsel %vm428, %v753, 0
      %v806 = vsel %vm428, %v754, 0
      %v809 = vsel %vm428, %v755, 0
      %v812 = vsel %vm428, %v756, 0
      %814 = vmatprep.subr.bf16.mxu0 0
      %815 = vmatpush1.bf16.msra.mxu0 %v782
      %816 = vmatprep.subr.bf16.mxu0 0
      %817 = vmatpush1.bf16.msra.mxu0 %v783
      %818 = vmatprep.subr.bf16.mxu0 0
      %819 = vmatpush1.bf16.msra.mxu0 %v784
      %820 = vmatprep.subr.bf16.mxu0 0
      %821 = vmatpush1.bf16.msra.mxu0 %v785
      %822 = vmatprep.subr.bf16.mxu0 0
      %823 = vmatpush1.bf16.msra.mxu0 0
      %824 = vmatprep.subr.bf16.mxu0 0
      %825 = vmatpush1.bf16.msra.mxu0 0
      %826 = vmatprep.subr.bf16.mxu0 0
      %827 = vmatpush1.bf16.msra.mxu0 0
      %828 = vmatprep.subr.bf16.mxu0 0
      %829 = vmatpush1.bf16.msra.mxu0 0
      %830 = vmatprep.subr.bf16.mxu0 0
      %831 = vmatpush1.bf16.msra.mxu0 0
      %832 = vmatprep.subr.bf16.mxu0 0
      %833 = vmatpush1.bf16.msra.mxu0 0
      %834 = vmatprep.subr.bf16.mxu0 0
      %835 = vmatpush1.bf16.msra.mxu0 0
      %836 = vmatprep.subr.bf16.mxu0 0
      %837 = vmatpush1.bf16.msra.mxu0 0
      %838 = vmatprep.subr.bf16.mxu0 0
      %839 = vmatpush1.bf16.msra.mxu0 0
      %840 = vmatprep.subr.bf16.mxu0 0
      %841 = vmatpush1.bf16.msra.mxu0 0
      %842 = vmatprep.subr.bf16.mxu0 0
      %843 = vmatpush1.bf16.msra.mxu0 0
      %844 = vmatprep.subr.bf16.mxu0 0
      %845 = vmatpush1.bf16.msra.mxu0 0
      %846 = vmatprep.mubr.bf16.mxu0 0
      %847 = vmatmul.mubr.bf16.gmra.mrb[0].mxu0 %v791
      %v848 = vpop.f32.mrb[0].mxu0
      %v849 = vadd.f32 0.0, %v848
      %v850 = vpop.f32.mrb[0].mxu0
      %v851 = vpop.f32.mrb[0].mxu0
      %v852 = vadd.f32 0.0, %v851
      %v853 = vpop.f32.mrb[0].mxu0
      %854 = vmatprep.mubr.bf16.mxu0 0
      %855 = vmatmul.mubr.bf16.gmra.mrb[0].mxu0 %v794
      %v856 = vpop.f32.mrb[0].mxu0
      %v857 = vadd.f32 0.0, %v856
      %v858 = vpop.f32.mrb[0].mxu0
      %v859 = vpop.f32.mrb[0].mxu0
      %v860 = vadd.f32 0.0, %v859
      %v861 = vpop.f32.mrb[0].mxu0
      %862 = vmatprep.mubr.bf16.mxu0 0
      %863 = vmatmul.mubr.bf16.gmra.mrb[0].mxu0 %v797
      %v864 = vpop.f32.mrb[0].mxu0
      %v865 = vadd.f32 0.0, %v864
      %v866 = vpop.f32.mrb[0].mxu0
      %v867 = vpop.f32.mrb[0].mxu0
      %v868 = vadd.f32 0.0, %v867
      %v869 = vpop.f32.mrb[0].mxu0
      %870 = vmatprep.mubr.bf16.mxu0 0
      %871 = vmatmul.mubr.bf16.gmra.mrb[0].mxu0 %v800
      %v872 = vpop.f32.mrb[0].mxu0
      %v873 = vadd.f32 0.0, %v872
      %v874 = vpop.f32.mrb[0].mxu0
      %v875 = vpop.f32.mrb[0].mxu0
      %v876 = vadd.f32 0.0, %v875
      %v877 = vpop.f32.mrb[0].mxu0
      %878 = vmatprep.mubr.bf16.mxu0 0
      %879 = vmatmul.mubr.bf16.gmra.mrb[0].mxu0 %v803
      %v880 = vpop.f32.mrb[0].mxu0
      %v881 = vadd.f32 0.0, %v880
      %v882 = vpop.f32.mrb[0].mxu0
      %v883 = vpop.f32.mrb[0].mxu0
      %v884 = vadd.f32 0.0, %v883
      %v885 = vpop.f32.mrb[0].mxu0
      %886 = vmatprep.mubr.bf16.mxu0 0
      %887 = vmatmul.mubr.bf16.gmra.mrb[0].mxu0 %v806
      %v888 = vpop.f32.mrb[0].mxu0
      %v889 = vadd.f32 0.0, %v888
      %v890 = vpop.f32.mrb[0].mxu0
      %v891 = vpop.f32.mrb[0].mxu0
      %v892 = vadd.f32 0.0, %v891
      %v893 = vpop.f32.mrb[0].mxu0
      %894 = vmatprep.mubr.bf16.mxu0 0
      %895 = vmatmul.mubr.bf16.gmra.mrb[0].mxu0 %v809
      %v896 = vpop.f32.mrb[0].mxu0
      %v897 = vadd.f32 0.0, %v896
      %v898 = vpop.f32.mrb[0].mxu0
      %v899 = vpop.f32.mrb[0].mxu0
      %v900 = vadd.f32 0.0, %v899
      %v901 = vpop.f32.mrb[0].mxu0
      %902 = vmatprep.mubr.bf16.mxu0 0
      %903 = vmatmul.mubr.bf16.gmra.mrb[0].mxu0 %v812
      %v904 = vpop.f32.mrb[0].mxu0
      %v905 = vadd.f32 0.0, %v904
      %v906 = vpop.f32.mrb[0].mxu0
      %v907 = vpop.f32.mrb[0].mxu0
      %v908 = vadd.f32 0.0, %v907
      %v909 = vpop.f32.mrb[0].mxu0
      %910 = vdwg.mxu0
      %v911 = vld [vmem:[%s2 + $0x3] sm:$0x1]
      %v912 = vlaneseq
      %v913 = vshrl.u32 %v912, 7
      %v914 = vsub.s32 0, %v913
      %v915 = vrot.slane %v911, %v914
      %v916 = vadd.f32 %v849, %v915
      %v917 = vadd.f32 %v852, %v915
      %v918 = vadd.f32 %v857, %v915
      %v919 = vadd.f32 %v860, %v915
      %v920 = vadd.f32 %v865, %v915
      %v921 = vadd.f32 %v868, %v915
      %v922 = vadd.f32 %v873, %v915
      %v923 = vadd.f32 %v876, %v915
      %v924 = vadd.f32 %v881, %v915
      %v925 = vadd.f32 %v884, %v915
      %v926 = vadd.f32 %v889, %v915
      %v927 = vadd.f32 %v892, %v915
      %v928 = vadd.f32 %v897, %v915
      %v929 = vadd.f32 %v900, %v915
      %v930 = vadd.f32 %v905, %v915
      %v931 = vadd.f32 %v908, %v915
      %vm932 = vcmask 64512
      %933 = vst.msk [vmem:[%s172] sm:$0xff] %vm932, %v916
      %934 = vst.msk [vmem:[%s172 + $0x8] sm:$0xff] %vm932, %v917
      %935 = vst.msk [vmem:[%s172 + $0x10] sm:$0xff] %vm932, %v918
      %936 = vst.msk [vmem:[%s172 + $0x18] sm:$0xff] %vm932, %v919
      %937 = vst.msk [vmem:[%s172 + $0x20] sm:$0xff] %vm932, %v920
      %938 = vst.msk [vmem:[%s172 + $0x28] sm:$0xff] %vm932, %v921
      %939 = vst.msk [vmem:[%s172 + $0x30] sm:$0xff] %vm932, %v922
      %940 = vst.msk [vmem:[%s172 + $0x38] sm:$0xff] %vm932, %v923
      %941 = vst.msk [vmem:[%s172 + $0x40] sm:$0xff] %vm932, %v924
      %942 = vst.msk [vmem:[%s172 + $0x48] sm:$0xff] %vm932, %v925
      %943 = vst.msk [vmem:[%s172 + $0x50] sm:$0xff] %vm932, %v926
      %944 = vst.msk [vmem:[%s172 + $0x58] sm:$0xff] %vm932, %v927
      %945 = vst.msk [vmem:[%s172 + $0x60] sm:$0xff] %vm932, %v928
      %946 = vst.msk [vmem:[%s172 + $0x68] sm:$0xff] %vm932, %v929
      %947 = vst.msk [vmem:[%s172 + $0x70] sm:$0xff] %vm932, %v930
      %948 = vst.msk [vmem:[%s172 + $0x78] sm:$0xff] %vm932, %v931
      %s949 = smul.u32 16, %s14
      %p950 = scmp.lt.s32.totalorder %s949, 31
      %s951 = scalar_select %p950, %s949, 31
      %s952 = smul.addr %s951, 8
      %s953 = scalar_lea.vmem %s3, %s952
      // Predicated region
      $region33: #{dueling_net_forward.1} parent=31 // pred_check
        %p954 = pneg %p100
      $region34: #{dueling_net_forward.1} parent=31 // pred_check_branch
        %956 = sbr.rel (%p954) target = $region36
      $region35: #{dueling_net_forward.1} parent=31 // pred_region
        %s957 = smul.u32 16, %s14
      $region36: #{dueling_net_forward.1} parent=31 // pred_fallthru
        _
    $region32: #{dueling_net_forward.1} parent=5 // pred_fallthru
      _
    %p958 = scmp.le.s32.totalorder 2, %s9
    // Predicated region
    $region37: #{dueling_net_forward.1} parent=5 // pred_check
      %p959 = pneg %p958
    $region38: #{dueling_net_forward.1} parent=5 // pred_check_branch
      %961 = sbr.rel (%p959) target = $region40
    $region39: #{dueling_net_forward.1} parent=5 // pred_region
      %s962 = ssub.s32 %s9, 2
      // Predicated region
      $region41: #{dueling_net_forward.1} parent=39 // pred_check
        %p963 = pneg %p106
      $region42: #{dueling_net_forward.1} parent=39 // pred_check_branch
        %965 = sbr.rel (%p963) target = $region44
      $region43: #{dueling_net_forward.1} parent=39 // pred_region
        %s966 = smul.u32 16, %s15
        %p967 = scmp.lt.s32.totalorder %s966, 31
        %s968 = scalar_select %p967, %s966, 31
        %s969 = smul.addr %s968, 8
        %s970 = scalar_lea.vmem %s3, %s969
      $region44: #{dueling_net_forward.1} parent=39 // pred_fallthru
        _
    $region40: #{dueling_net_forward.1} parent=5 // pred_fallthru
      _
  $region6: #{dueling_net_forward.1} parent=0 // loop_footer
    %s13 = sadd.s32 1, %s9
  $region7: #{dueling_net_forward.1} parent=0 // loop_footer_branch
    %8 = sbr.rel target = $region3
  $region8: #{dueling_net_forward.1} parent=0 // loop_exit
    _

</llo_original>
